<compile_context>
chip_gen: v7x
topology: tpu7x:2x2x1
jax: 0.10.0
libtpu: 0.0.40
codegen_flags: <defaults>
</compile_context>

<pallas_src>
import jax
import jax.numpy as jnp
from jax.experimental import pallas as pl
from jax.experimental.pallas import tpu as pltpu


def mlp_kernel(x_ref, w1_ref, b1_ref, w2_ref, b2_ref, w3_ref, b3_ref, o_ref):
    # In-kernel bf16 cast of the activation tile (hides under the MXU).
    x = x_ref[...].astype(jnp.bfloat16)
    # Layer 1: Linear (bf16 operands, f32 accumulate) + bias + ReLU (f32 epilogue).
    h = jnp.dot(x, w1_ref[...], preferred_element_type=jnp.float32)
    h = jnp.maximum(h + b1_ref[...], 0.0)
    # Dropout == identity (eval mode).
    # Layer 2
    h = jnp.dot(h.astype(jnp.bfloat16), w2_ref[...],
                preferred_element_type=jnp.float32)
    h = jnp.maximum(h + b2_ref[...], 0.0)
    # Layer 3 (the PyTorch Sequential applies ReLU after the last Linear too).
    h = jnp.dot(h.astype(jnp.bfloat16), w3_ref[...],
                preferred_element_type=jnp.float32)
    h = jnp.maximum(h + b3_ref[...], 0.0)
    o_ref[...] = h.astype(o_ref.dtype)


def _round_up(n, m):
    return ((n + m - 1) // m) * m


def _pad2(a, rows, cols):
    return jnp.pad(a, ((0, rows - a.shape[0]), (0, cols - a.shape[1])))


def init_params(key, input_size, h1, h2, out_size):
    ks = jax.random.split(key, 6)
    scale = lambda fan_in: 1.0 / jnp.sqrt(fan_in)
    # Stored as (in, out) == torch Linear weight transposed.
    return {
        "w1": jax.random.uniform(ks[0], (input_size, h1), jnp.float32,
                                 -scale(input_size), scale(input_size)),
        "b1": jax.random.uniform(ks[1], (1, h1), jnp.float32,
                                 -scale(input_size), scale(input_size)),
        "w2": jax.random.uniform(ks[2], (h1, h2), jnp.float32,
                                 -scale(h1), scale(h1)),
        "b2": jax.random.uniform(ks[3], (1, h2), jnp.float32,
                                 -scale(h1), scale(h1)),
        "w3": jax.random.uniform(ks[4], (h2, out_size), jnp.float32,
                                 -scale(h2), scale(h2)),
        "b3": jax.random.uniform(ks[5], (1, out_size), jnp.float32,
                                 -scale(h2), scale(h2)),
    }


def prepare_params(params):
    """One-time prep: lane-dense (128) zero padding + bf16 weight casts.

    Do this once (or under jit as a cached constant), NOT per forward call.
    Zero padding is exact: padded K columns contribute 0, padded output
    columns are sliced off in the wrapper.
    """
    w1, b1 = params["w1"], params["b1"]
    w2, b2 = params["w2"], params["b2"]
    w3, b3 = params["w3"], params["b3"]

    K1, H1 = w1.shape
    H2 = w2.shape[1]
    OUT = w3.shape[1]

    K1p = _round_up(K1, 128)
    H1p = _round_up(H1, 128)
    H2p = _round_up(H2, 128)
    OUTp = _round_up(OUT, 128)

    prepped = {
        # Matmul operands in bf16 (f32 accumulation in-kernel); biases stay f32.
        "w1": _pad2(w1, K1p, H1p).astype(jnp.bfloat16),
        "w2": _pad2(w2, H1p, H2p).astype(jnp.bfloat16),
        "w3": _pad2(w3, H2p, OUTp).astype(jnp.bfloat16),
        "b1": _pad2(b1, 1, H1p).astype(jnp.float32),
        "b2": _pad2(b2, 1, H2p).astype(jnp.float32),
        "b3": _pad2(b3, 1, OUTp).astype(jnp.float32),
    }
    dims = {"K1": K1, "K1p": K1p, "H1p": H1p, "H2p": H2p, "OUT": OUT, "OUTp": OUTp}
    return prepped, dims


def mlp_forward(x_nchw, prepped, dims):
    """x_nchw: (B, C, H, W) float32.  prepped/dims: output of prepare_params."""
    B = x_nchw.shape[0]
    x2d = x_nchw.reshape(B, -1)  # nn.Flatten (row-major over C, H, W)

    K1, K1p = dims["K1"], dims["K1p"]
    H1p, H2p = dims["H1p"], dims["H2p"]
    OUT, OUTp = dims["OUT"], dims["OUTp"]

    # Input feature dim: no-op at this config (1024 is already a multiple of 128).
    if K1 != K1p:
        x2d = jnp.pad(x2d, ((0, 0), (0, K1p - K1)))

    # Batch tiling:
    #   * tiny batch (B < 8): single full-array block, no padding, no over-compute.
    #   * otherwise: TM up to 512 (multiple of 8), sized so n_tiles >= 2 when
    #     possible so "parallel" can split across the two TCs on v7x.
    if B < 8:
        TM = B
        B_pad = B
    else:
        TM = min(512, _round_up(max(8, (B + 1) // 2), 8))
        B_pad = _round_up(B, TM)
        if B_pad != B:
            x2d = jnp.pad(x2d, ((0, B_pad - B), (0, 0)))
    n_tiles = B_pad // TM

    tile_map = lambda i: (i, 0)      # batch-tiled operands (x / out)
    resident_map = lambda i: (0, 0)  # weights/biases resident across grid steps

    flops = 2 * B_pad * (K1p * H1p + H1p * H2p + H2p * OUTp)
    bytes_accessed = (
        B_pad * K1p * 4                                   # x (f32 in, cast in-kernel)
        + (prepped["w1"].size + prepped["w2"].size + prepped["w3"].size) * 2
        + (prepped["b1"].size + prepped["b2"].size + prepped["b3"].size) * 4
        + B_pad * OUTp * 4                                # output (f32)
    )

    out = pl.pallas_call(
        mlp_kernel,
        out_shape=jax.ShapeDtypeStruct((B_pad, OUTp), jnp.float32),
        grid=(n_tiles,),
        in_specs=[
            pl.BlockSpec((TM, K1p), tile_map),
            pl.BlockSpec((K1p, H1p), resident_map),
            pl.BlockSpec((1, H1p), resident_map),
            pl.BlockSpec((H1p, H2p), resident_map),
            pl.BlockSpec((1, H2p), resident_map),
            pl.BlockSpec((H2p, OUTp), resident_map),
            pl.BlockSpec((1, OUTp), resident_map),
        ],
        out_specs=pl.BlockSpec((TM, OUTp), tile_map),
        compiler_params=pltpu.CompilerParams(
            dimension_semantics=("parallel",),
        ),
        cost_estimate=pl.CostEstimate(
            flops=flops, transcendentals=0, bytes_accessed=bytes_accessed
        ),
    )(x2d, prepped["w1"], prepped["b1"], prepped["w2"], prepped["b2"],
      prepped["w3"], prepped["b3"])

    return out[:B, :OUT]


def mlp_reference(x_nchw, params):
    # f32 reference (eval-mode dropout == identity).
    x = x_nchw.reshape(x_nchw.shape[0], -1)
    h = jnp.maximum(x @ params["w1"] + params["b1"], 0.0)
    h = jnp.maximum(h @ params["w2"] + params["b2"], 0.0)
    return jnp.maximum(h @ params["w3"] + params["b3"], 0.0)


if __name__ == "__main__":
    # config['MLP'] = {input_size: 4*16*16=1024, hidden_size_1: 256,
    #                  hidden_size_2: 128, output_size: 32, dropout: 0.1}
    B, C, H, W = 2, 4, 16, 16
    input_size = C * H * W          # 1024
    hidden_1, hidden_2, out_size = 256, 128, 32

    key = jax.random.PRNGKey(0)
    kx, kp = jax.random.split(key)
    x = jax.random.normal(kx, (B, C, H, W), jnp.float32)
    params = init_params(kp, input_size, hidden_1, hidden_2, out_size)

    # One-time weight prep (padding + bf16 cast) — hoisted out of the forward path.
    prepped, dims = prepare_params(params)
    prepped = jax.tree_util.tree_map(jax.block_until_ready, prepped)

    y = mlp_forward(x, prepped, dims)
    y = jax.block_until_ready(y)

    y_ref = mlp_reference(x, params)
    assert y.shape == (B, out_size)
    # bf16 matmul operands -> looser tolerance vs the f32 reference.
    assert jnp.allclose(y, y_ref, atol=5e-2, rtol=5e-2), "mismatch vs reference"

    print("KERNEL_OK")
</pallas_src>

<mosaic_0001>
module attributes {stable_mosaic.version = 11 : i64} {
  func.func @mlp_kernel(%arg0: i32, %arg1: memref<2x1024xf32, #tpu.memory_space<vmem>>, %arg2: memref<1024x256xbf16, #tpu.memory_space<vmem>>, %arg3: memref<1x256xf32, #tpu.memory_space<vmem>>, %arg4: memref<256x128xbf16, #tpu.memory_space<vmem>>, %arg5: memref<1x128xf32, #tpu.memory_space<vmem>>, %arg6: memref<128x128xbf16, #tpu.memory_space<vmem>>, %arg7: memref<1x128xf32, #tpu.memory_space<vmem>>, %arg8: memref<2x128xf32, #tpu.memory_space<vmem>>) attributes {dimension_semantics = [#tpu.dimension_semantics<parallel>], iteration_bounds = array<i64: 1>, scalar_prefetch = 0 : i64, scratch_operands = 0 : i64, tpu.core_type = #tpu.core_type<tc>, window_params = [{transform_indices = @transform_0, window_bounds = array<i64: 2, 1024>}, {pipeline_mode = #tpu.pipeline_mode<synchronous>, transform_indices = @transform_1, window_bounds = array<i64: 1024, 256>}, {pipeline_mode = #tpu.pipeline_mode<synchronous>, transform_indices = @transform_2, window_bounds = array<i64: 1, 256>}, {pipeline_mode = #tpu.pipeline_mode<synchronous>, transform_indices = @transform_3, window_bounds = array<i64: 256, 128>}, {pipeline_mode = #tpu.pipeline_mode<synchronous>, transform_indices = @transform_4, window_bounds = array<i64: 1, 128>}, {pipeline_mode = #tpu.pipeline_mode<synchronous>, transform_indices = @transform_5, window_bounds = array<i64: 128, 128>}, {pipeline_mode = #tpu.pipeline_mode<synchronous>, transform_indices = @transform_6, window_bounds = array<i64: 1, 128>}, {transform_indices = @transform_7, window_bounds = array<i64: 2, 128>}]} {
    %c0 = arith.constant 0 : index
    %c0_0 = arith.constant 0 : index
    %0 = vector.load %arg1[%c0, %c0_0] : memref<2x1024xf32, #tpu.memory_space<vmem>>, vector<2x1024xf32>
    %1 = arith.truncf %0 : vector<2x1024xf32> to vector<2x1024xbf16>
    %c0_1 = arith.constant 0 : index
    %c0_2 = arith.constant 0 : index
    %2 = vector.load %arg2[%c0_1, %c0_2] : memref<1024x256xbf16, #tpu.memory_space<vmem>>, vector<1024x256xbf16>
    %cst = arith.constant dense<0.000000e+00> : vector<2x256xf32>
    %3 = tpu.matmul %1, %2, %cst {dimension_numbers = #tpu.dot_dimension_numbers<[1], [0], [0], [1], [0, 0, 1, 1], [], []>} : vector<2x1024xbf16>, vector<1024x256xbf16>, vector<2x256xf32> -> vector<2x256xf32>
    %c0_3 = arith.constant 0 : index
    %c0_4 = arith.constant 0 : index
    %4 = vector.load %arg3[%c0_3, %c0_4] : memref<1x256xf32, #tpu.memory_space<vmem>>, vector<1x256xf32>
    %5 = vector.broadcast %4 : vector<1x256xf32> to vector<2x256xf32>
    %6 = arith.addf %3, %5 : vector<2x256xf32>
    %cst_5 = arith.constant 0.000000e+00 : f32
    %7 = vector.broadcast %cst_5 : f32 to vector<2x256xf32>
    %8 = arith.maximumf %6, %7 : vector<2x256xf32>
    %9 = arith.truncf %8 : vector<2x256xf32> to vector<2x256xbf16>
    %c0_6 = arith.constant 0 : index
    %c0_7 = arith.constant 0 : index
    %10 = vector.load %arg4[%c0_6, %c0_7] : memref<256x128xbf16, #tpu.memory_space<vmem>>, vector<256x128xbf16>
    %cst_8 = arith.constant dense<0.000000e+00> : vector<2x128xf32>
    %11 = tpu.matmul %9, %10, %cst_8 {dimension_numbers = #tpu.dot_dimension_numbers<[1], [0], [0], [1], [0, 0, 1, 1], [], []>} : vector<2x256xbf16>, vector<256x128xbf16>, vector<2x128xf32> -> vector<2x128xf32>
    %c0_9 = arith.constant 0 : index
    %c0_10 = arith.constant 0 : index
    %12 = vector.load %arg5[%c0_9, %c0_10] : memref<1x128xf32, #tpu.memory_space<vmem>>, vector<1x128xf32>
    %13 = vector.broadcast %12 : vector<1x128xf32> to vector<2x128xf32>
    %14 = arith.addf %11, %13 : vector<2x128xf32>
    %cst_11 = arith.constant 0.000000e+00 : f32
    %15 = vector.broadcast %cst_11 : f32 to vector<2x128xf32>
    %16 = arith.maximumf %14, %15 : vector<2x128xf32>
    %17 = arith.truncf %16 : vector<2x128xf32> to vector<2x128xbf16>
    %c0_12 = arith.constant 0 : index
    %c0_13 = arith.constant 0 : index
    %18 = vector.load %arg6[%c0_12, %c0_13] : memref<128x128xbf16, #tpu.memory_space<vmem>>, vector<128x128xbf16>
    %cst_14 = arith.constant dense<0.000000e+00> : vector<2x128xf32>
    %19 = tpu.matmul %17, %18, %cst_14 {dimension_numbers = #tpu.dot_dimension_numbers<[1], [0], [0], [1], [0, 0, 1, 1], [], []>} : vector<2x128xbf16>, vector<128x128xbf16>, vector<2x128xf32> -> vector<2x128xf32>
    %c0_15 = arith.constant 0 : index
    %c0_16 = arith.constant 0 : index
    %20 = vector.load %arg7[%c0_15, %c0_16] : memref<1x128xf32, #tpu.memory_space<vmem>>, vector<1x128xf32>
    %21 = vector.broadcast %20 : vector<1x128xf32> to vector<2x128xf32>
    %22 = arith.addf %19, %21 : vector<2x128xf32>
    %cst_17 = arith.constant 0.000000e+00 : f32
    %23 = vector.broadcast %cst_17 : f32 to vector<2x128xf32>
    %24 = arith.maximumf %22, %23 : vector<2x128xf32>
    %c0_18 = arith.constant 0 : index
    %c0_19 = arith.constant 0 : index
    %25 = vector.load %arg8[%c0_18, %c0_19] : memref<2x128xf32, #tpu.memory_space<vmem>>, vector<2x128xf32>
    tpu.vector_store %arg8[%c0_18, %c0_19], %24 {strides = array<i32>} : memref<2x128xf32, #tpu.memory_space<vmem>>, vector<2x128xf32>,
    return
  }
  func.func @transform_0(%arg0: i32) -> (i32, i32) {
    %c0_i32 = arith.constant 0 : i32
    %c0_i32_0 = arith.constant 0 : i32
    return %arg0, %c0_i32 : i32, i32
  }
  func.func @transform_1(%arg0: i32) -> (i32, i32) {
    %c0_i32 = arith.constant 0 : i32
    %c0_i32_0 = arith.constant 0 : i32
    %c0_i32_1 = arith.constant 0 : i32
    return %c0_i32, %c0_i32_0 : i32, i32
  }
  func.func @transform_2(%arg0: i32) -> (i32, i32) {
    %c0_i32 = arith.constant 0 : i32
    %c0_i32_0 = arith.constant 0 : i32
    %c0_i32_1 = arith.constant 0 : i32
    return %c0_i32, %c0_i32_0 : i32, i32
  }
  func.func @transform_3(%arg0: i32) -> (i32, i32) {
    %c0_i32 = arith.constant 0 : i32
    %c0_i32_0 = arith.constant 0 : i32
    %c0_i32_1 = arith.constant 0 : i32
    return %c0_i32, %c0_i32_0 : i32, i32
  }
  func.func @transform_4(%arg0: i32) -> (i32, i32) {
    %c0_i32 = arith.constant 0 : i32
    %c0_i32_0 = arith.constant 0 : i32
    %c0_i32_1 = arith.constant 0 : i32
    return %c0_i32, %c0_i32_0 : i32, i32
  }
  func.func @transform_5(%arg0: i32) -> (i32, i32) {
    %c0_i32 = arith.constant 0 : i32
    %c0_i32_0 = arith.constant 0 : i32
    %c0_i32_1 = arith.constant 0 : i32
    return %c0_i32, %c0_i32_0 : i32, i32
  }
  func.func @transform_6(%arg0: i32) -> (i32, i32) {
    %c0_i32 = arith.constant 0 : i32
    %c0_i32_0 = arith.constant 0 : i32
    %c0_i32_1 = arith.constant 0 : i32
    return %c0_i32, %c0_i32_0 : i32, i32
  }
  func.func @transform_7(%arg0: i32) -> (i32, i32) {
    %c0_i32 = arith.constant 0 : i32
    %c0_i32_0 = arith.constant 0 : i32
    return %arg0, %c0_i32 : i32, i32
  }
}

</mosaic_0001>

<llo_original>
// kernel: tpu_custom_call.1
$region0: #{tpu_custom_call.1}
  #allocation0 [shape = 'u32[]', space=smem, size = 0x4, offset = 0x4, fixed_abs, tag = 'smem constant byte address 0x4 - core index']
  #allocation1 [shape = 'u32[144,128]{1,0:T(1,128)}', space=vmem, size = 0x12000, scoped, tag = 'internal scratch']
  %s0 = inlined_call_operand.hbm [shape: f32[2,1024], index: 0, kind: input, shape index: {}]
  %s1 = inlined_call_operand.hbm [shape: bf16[1024,256], index: 1, kind: input, shape index: {}]
  %s2 = inlined_call_operand.vmem [shape: f32[1,256], index: 2, kind: input, shape index: {}]
  %s3 = inlined_call_operand.hbm [shape: bf16[256,128], index: 3, kind: input, shape index: {}]
  %s4 = inlined_call_operand.vmem [shape: f32[1,128], index: 4, kind: input, shape index: {}]
  %s5 = inlined_call_operand.hbm [shape: bf16[128,128], index: 5, kind: input, shape index: {}]
  %s6 = inlined_call_operand.vmem [shape: f32[1,128], index: 6, kind: input, shape index: {}]
  %s7 = inlined_call_operand.hbm [shape: f32[2,128], index: 7, kind: output, shape index: {}]
  %s8 = sld [smem:[#allocation0]]
  $region54: #{tpu_custom_call.1} parent=0
    _
  %s10 = ssub.s32 1, %s8
  %s11 = scalar_select 0, %s10, %s8
  $region1: #{tpu_custom_call.1} parent=0
    #allocation2 [shape = 'u8[8192]{0}', space=vmem, size = 0x2000, scoped, tag = 'input window, operand 0, single buffered']
    #allocation3 [shape = 's32[1]{0}', space=sflag, size = 0x4, scoped, tag = 'scoped memory for tpu_custom_call.1']
    #allocation4 [shape = 's32[1]{0}', space=sflag, size = 0x4, scoped, tag = 'scoped memory for tpu_custom_call.1']
    #allocation5 [shape = 'u8[524288]{0}', space=vmem, size = 0x80000, scoped, tag = 'input window, operand 1, single buffered']
    #allocation6 [shape = 's32[1]{0}', space=sflag, size = 0x4, scoped, tag = 'scoped memory for tpu_custom_call.1']
    #allocation7 [shape = 'u8[65536]{0}', space=vmem, size = 0x10000, scoped, tag = 'input window, operand 3, single buffered']
    #allocation8 [shape = 'u8[32768]{0}', space=vmem, size = 0x8000, scoped, tag = 'input window, operand 5, single buffered']
    #allocation9 [shape = 's32[1]{0}', space=sflag, size = 0x4, scoped, tag = 'scoped memory for tpu_custom_call.1']
    #allocation10 [shape = 'u8[1024]{0}', space=vmem, size = 0x400, scoped, tag = 'output window, operand 0, single buffered']
    %12 = vsyncpa [#allocation3], 0
    %13 = vsyncpa [#allocation6], 0
    %14 = vsyncpa [#allocation9], 0
    %15 = vsyncpa [#allocation4], 0
    // Predicated region
    $region2: #{tpu_custom_call.1} parent=1 // pred_check
      _
    $region3: #{tpu_custom_call.1} parent=1 // pred_check_branch
      %17 = sbr.rel (0) target = $region5
    $region4: #{tpu_custom_call.1} parent=1 // pred_region
      %s19 = ssub.s32 256, 256
      %20 = vsyncadd [#allocation3], %s19
      %s22 = sshll.u32 [#allocation2], 4
      %s23 = int_to_ptr.vmem [resolvable:$true] %s22
      %25 = dma.hbm_to_vmem [thread:$0]  %s0, 256, %s23, [#allocation3]
    $region5: #{tpu_custom_call.1} parent=1 // pred_fallthru
      _
    // Predicated region
    $region6: #{tpu_custom_call.1} parent=1 // pred_check
      _
    $region7: #{tpu_custom_call.1} parent=1 // pred_check_branch
      %27 = sbr.rel (0) target = $region9
    $region8: #{tpu_custom_call.1} parent=1 // pred_region
      %s29 = ssub.s32 16384, 16384
      %30 = vsyncadd [#allocation6], %s29
      %s31 = sshll.u32 [#allocation5], 4
      %s32 = int_to_ptr.vmem [resolvable:$true] %s31
      %37 = dma.hbm_to_vmem [thread:$0]  %s1, 16384, %s32, [#allocation6], 128, 128, 8
    $region9: #{tpu_custom_call.1} parent=1 // pred_fallthru
      _
    // Predicated region
    $region10: #{tpu_custom_call.1} parent=1 // pred_check
      _
    $region11: #{tpu_custom_call.1} parent=1 // pred_check_branch
      %39 = sbr.rel (0) target = $region13
    $region12: #{tpu_custom_call.1} parent=1 // pred_region
      _
    $region13: #{tpu_custom_call.1} parent=1 // pred_fallthru
      _
    // Predicated region
    $region14: #{tpu_custom_call.1} parent=1 // pred_check
      _
    $region15: #{tpu_custom_call.1} parent=1 // pred_check_branch
      %41 = sbr.rel (0) target = $region17
    $region16: #{tpu_custom_call.1} parent=1 // pred_region
      %s43 = ssub.s32 2048, 2048
      %44 = vsyncadd [#allocation6], %s43
      %s45 = sshll.u32 [#allocation7], 4
      %s46 = int_to_ptr.vmem [resolvable:$true] %s45
      %51 = dma.hbm_to_vmem [thread:$0]  %s3, 2048, %s46, [#allocation6], 64, 64, 4
    $region17: #{tpu_custom_call.1} parent=1 // pred_fallthru
      _
    // Predicated region
    $region18: #{tpu_custom_call.1} parent=1 // pred_check
      _
    $region19: #{tpu_custom_call.1} parent=1 // pred_check_branch
      %53 = sbr.rel (0) target = $region21
    $region20: #{tpu_custom_call.1} parent=1 // pred_region
      _
    $region21: #{tpu_custom_call.1} parent=1 // pred_fallthru
      _
    // Predicated region
    $region22: #{tpu_custom_call.1} parent=1 // pred_check
      _
    $region23: #{tpu_custom_call.1} parent=1 // pred_check_branch
      %55 = sbr.rel (0) target = $region25
    $region24: #{tpu_custom_call.1} parent=1 // pred_region
      %s57 = ssub.s32 1024, 1024
      %58 = vsyncadd [#allocation9], %s57
      %s59 = sshll.u32 [#allocation8], 4
      %s60 = int_to_ptr.vmem [resolvable:$true] %s59
      %65 = dma.hbm_to_vmem [thread:$0]  %s5, 1024, %s60, [#allocation9], 64, 64, 4
    $region25: #{tpu_custom_call.1} parent=1 // pred_fallthru
      _
    // Predicated region
    $region26: #{tpu_custom_call.1} parent=1 // pred_check
      _
    $region27: #{tpu_custom_call.1} parent=1 // pred_check_branch
      %67 = sbr.rel (0) target = $region29
    $region28: #{tpu_custom_call.1} parent=1 // pred_region
      _
    $region29: #{tpu_custom_call.1} parent=1 // pred_fallthru
      _
    // Predicated region
    $region30: #{tpu_custom_call.1} parent=1 // pred_check
      _
    $region31: #{tpu_custom_call.1} parent=1 // pred_check_branch
      %69 = sbr.rel (0) target = $region33
    $region32: #{tpu_custom_call.1} parent=1 // pred_region
      %70 = dma.done [#allocation3], 256
    $region33: #{tpu_custom_call.1} parent=1 // pred_fallthru
      _
    // Predicated region
    $region34: #{tpu_custom_call.1} parent=1 // pred_check
      _
    $region35: #{tpu_custom_call.1} parent=1 // pred_check_branch
      %72 = sbr.rel (0) target = $region37
    $region36: #{tpu_custom_call.1} parent=1 // pred_region
      %73 = dma.done [#allocation6], 16384
    $region37: #{tpu_custom_call.1} parent=1 // pred_fallthru
      _
    // Predicated region
    $region38: #{tpu_custom_call.1} parent=1 // pred_check
      _
    $region39: #{tpu_custom_call.1} parent=1 // pred_check_branch
      %75 = sbr.rel (0) target = $region41
    $region40: #{tpu_custom_call.1} parent=1 // pred_region
      %76 = dma.done [#allocation6], 2048
    $region41: #{tpu_custom_call.1} parent=1 // pred_fallthru
      _
    // Predicated region
    $region42: #{tpu_custom_call.1} parent=1 // pred_check
      _
    $region43: #{tpu_custom_call.1} parent=1 // pred_check_branch
      %78 = sbr.rel (0) target = $region45
    $region44: #{tpu_custom_call.1} parent=1 // pred_region
      %79 = dma.done [#allocation9], 1024
    $region45: #{tpu_custom_call.1} parent=1 // pred_fallthru
      _
    %v81 = vld [vmem:[#allocation2] sm:$0xff]
    %v82 = vld [vmem:[#allocation2 + $0x8] sm:$0xff]
    %v85 = vcombine.high %v81, %v81
    %v87 = vunpack.c.l.s4 1983009808
    %v88 = vunpack.c.0.s8 %v87
    %v89 = vlaneseq
    %v90 = vshrl.u32 %v89, 7
    %v91 = vsub.s32 %v88, %v90
    %v92 = vrot.slane %v81, %v91
    %v94 = vunpack.c.l.s4 1983009808
    %v95 = vunpack.c.0.s8 %v94
    %v96 = vlaneseq
    %v97 = vshrl.u32 %v96, 7
    %v98 = vsub.s32 %v95, %v97
    %v99 = vrot.slane %v85, %v98
    %v100 = vcombine.high %v92, %v92
    %v101 = vcombine.high %v99, %v99
    %v102 = vcombine.high %v82, %v82
    %v104 = vunpack.c.l.s4 1983009808
    %v105 = vunpack.c.0.s8 %v104
    %v106 = vlaneseq
    %v107 = vshrl.u32 %v106, 7
    %v108 = vsub.s32 %v105, %v107
    %v109 = vrot.slane %v82, %v108
    %v111 = vunpack.c.l.s4 1983009808
    %v112 = vunpack.c.0.s8 %v111
    %v113 = vlaneseq
    %v114 = vshrl.u32 %v113, 7
    %v115 = vsub.s32 %v112, %v114
    %v116 = vrot.slane %v102, %v115
    %v117 = vcombine.high %v109, %v109
    %v118 = vcombine.high %v116, %v116
    %v127 = vpack.c.bf16 %v92, %v92
    %v128 = vpack.c.bf16 %v100, %v100
    %v129 = vpack.c.bf16 %v99, %v99
    %v130 = vpack.c.bf16 %v101, %v101
    %v131 = vpack.c.bf16 %v109, %v109
    %v132 = vpack.c.bf16 %v117, %v117
    %v133 = vpack.c.bf16 %v116, %v116
    %v134 = vpack.c.bf16 %v118, %v118
    %v135 = vld [vmem:[#allocation5] sm:$0xff]
    %v136 = vld [vmem:[#allocation5 + $0x8] sm:$0xff]
    %v137 = vld [vmem:[#allocation5 + $0x10] sm:$0xff]
    %v138 = vld [vmem:[#allocation5 + $0x18] sm:$0xff]
    %v139 = vld [vmem:[#allocation5 + $0x20] sm:$0xff]
    %v140 = vld [vmem:[#allocation5 + $0x28] sm:$0xff]
    %v141 = vld [vmem:[#allocation5 + $0x30] sm:$0xff]
    %v142 = vld [vmem:[#allocation5 + $0x38] sm:$0xff]
    %v143 = vld [vmem:[#allocation5 + $0x40] sm:$0xff]
    %v144 = vld [vmem:[#allocation5 + $0x48] sm:$0xff]
    %v145 = vld [vmem:[#allocation5 + $0x50] sm:$0xff]
    %v146 = vld [vmem:[#allocation5 + $0x58] sm:$0xff]
    %v147 = vld [vmem:[#allocation5 + $0x60] sm:$0xff]
    %v148 = vld [vmem:[#allocation5 + $0x68] sm:$0xff]
    %v149 = vld [vmem:[#allocation5 + $0x70] sm:$0xff]
    %v150 = vld [vmem:[#allocation5 + $0x78] sm:$0xff]
    %v151 = vld [vmem:[#allocation5 + $0x80] sm:$0xff]
    %v152 = vld [vmem:[#allocation5 + $0x88] sm:$0xff]
    %v153 = vld [vmem:[#allocation5 + $0x90] sm:$0xff]
    %v154 = vld [vmem:[#allocation5 + $0x98] sm:$0xff]
    %v155 = vld [vmem:[#allocation5 + $0xa0] sm:$0xff]
    %v156 = vld [vmem:[#allocation5 + $0xa8] sm:$0xff]
    %v157 = vld [vmem:[#allocation5 + $0xb0] sm:$0xff]
    %v158 = vld [vmem:[#allocation5 + $0xb8] sm:$0xff]
    %v159 = vld [vmem:[#allocation5 + $0xc0] sm:$0xff]
    %v160 = vld [vmem:[#allocation5 + $0xc8] sm:$0xff]
    %v161 = vld [vmem:[#allocation5 + $0xd0] sm:$0xff]
    %v162 = vld [vmem:[#allocation5 + $0xd8] sm:$0xff]
    %v163 = vld [vmem:[#allocation5 + $0xe0] sm:$0xff]
    %v164 = vld [vmem:[#allocation5 + $0xe8] sm:$0xff]
    %v165 = vld [vmem:[#allocation5 + $0xf0] sm:$0xff]
    %v166 = vld [vmem:[#allocation5 + $0xf8] sm:$0xff]
    %v167 = vld [vmem:[#allocation5 + $0x100] sm:$0xff]
    %v168 = vld [vmem:[#allocation5 + $0x108] sm:$0xff]
    %v169 = vld [vmem:[#allocation5 + $0x110] sm:$0xff]
    %v170 = vld [vmem:[#allocation5 + $0x118] sm:$0xff]
    %v171 = vld [vmem:[#allocation5 + $0x120] sm:$0xff]
    %v172 = vld [vmem:[#allocation5 + $0x128] sm:$0xff]
    %v173 = vld [vmem:[#allocation5 + $0x130] sm:$0xff]
    %v174 = vld [vmem:[#allocation5 + $0x138] sm:$0xff]
    %v175 = vld [vmem:[#allocation5 + $0x140] sm:$0xff]
    %v176 = vld [vmem:[#allocation5 + $0x148] sm:$0xff]
    %v177 = vld [vmem:[#allocation5 + $0x150] sm:$0xff]
    %v178 = vld [vmem:[#allocation5 + $0x158] sm:$0xff]
    %v179 = vld [vmem:[#allocation5 + $0x160] sm:$0xff]
    %v180 = vld [vmem:[#allocation5 + $0x168] sm:$0xff]
    %v181 = vld [vmem:[#allocation5 + $0x170] sm:$0xff]
    %v182 = vld [vmem:[#allocation5 + $0x178] sm:$0xff]
    %v183 = vld [vmem:[#allocation5 + $0x180] sm:$0xff]
    %v184 = vld [vmem:[#allocation5 + $0x188] sm:$0xff]
    %v185 = vld [vmem:[#allocation5 + $0x190] sm:$0xff]
    %v186 = vld [vmem:[#allocation5 + $0x198] sm:$0xff]
    %v187 = vld [vmem:[#allocation5 + $0x1a0] sm:$0xff]
    %v188 = vld [vmem:[#allocation5 + $0x1a8] sm:$0xff]
    %v189 = vld [vmem:[#allocation5 + $0x1b0] sm:$0xff]
    %v190 = vld [vmem:[#allocation5 + $0x1b8] sm:$0xff]
    %v191 = vld [vmem:[#allocation5 + $0x1c0] sm:$0xff]
    %v192 = vld [vmem:[#allocation5 + $0x1c8] sm:$0xff]
    %v193 = vld [vmem:[#allocation5 + $0x1d0] sm:$0xff]
    %v194 = vld [vmem:[#allocation5 + $0x1d8] sm:$0xff]
    %v195 = vld [vmem:[#allocation5 + $0x1e0] sm:$0xff]
    %v196 = vld [vmem:[#allocation5 + $0x1e8] sm:$0xff]
    %v197 = vld [vmem:[#allocation5 + $0x1f0] sm:$0xff]
    %v198 = vld [vmem:[#allocation5 + $0x1f8] sm:$0xff]
    %v199 = vld [vmem:[#allocation5 + $0x200] sm:$0xff]
    %v200 = vld [vmem:[#allocation5 + $0x208] sm:$0xff]
    %v201 = vld [vmem:[#allocation5 + $0x210] sm:$0xff]
    %v202 = vld [vmem:[#allocation5 + $0x218] sm:$0xff]
    %v203 = vld [vmem:[#allocation5 + $0x220] sm:$0xff]
    %v204 = vld [vmem:[#allocation5 + $0x228] sm:$0xff]
    %v205 = vld [vmem:[#allocation5 + $0x230] sm:$0xff]
    %v206 = vld [vmem:[#allocation5 + $0x238] sm:$0xff]
    %v207 = vld [vmem:[#allocation5 + $0x240] sm:$0xff]
    %v208 = vld [vmem:[#allocation5 + $0x248] sm:$0xff]
    %v209 = vld [vmem:[#allocation5 + $0x250] sm:$0xff]
    %v210 = vld [vmem:[#allocation5 + $0x258] sm:$0xff]
    %v211 = vld [vmem:[#allocation5 + $0x260] sm:$0xff]
    %v212 = vld [vmem:[#allocation5 + $0x268] sm:$0xff]
    %v213 = vld [vmem:[#allocation5 + $0x270] sm:$0xff]
    %v214 = vld [vmem:[#allocation5 + $0x278] sm:$0xff]
    %v215 = vld [vmem:[#allocation5 + $0x280] sm:$0xff]
    %v216 = vld [vmem:[#allocation5 + $0x288] sm:$0xff]
    %v217 = vld [vmem:[#allocation5 + $0x290] sm:$0xff]
    %v218 = vld [vmem:[#allocation5 + $0x298] sm:$0xff]
    %v219 = vld [vmem:[#allocation5 + $0x2a0] sm:$0xff]
    %v220 = vld [vmem:[#allocation5 + $0x2a8] sm:$0xff]
    %v221 = vld [vmem:[#allocation5 + $0x2b0] sm:$0xff]
    %v222 = vld [vmem:[#allocation5 + $0x2b8] sm:$0xff]
    %v223 = vld [vmem:[#allocation5 + $0x2c0] sm:$0xff]
    %v224 = vld [vmem:[#allocation5 + $0x2c8] sm:$0xff]
    %v225 = vld [vmem:[#allocation5 + $0x2d0] sm:$0xff]
    %v226 = vld [vmem:[#allocation5 + $0x2d8] sm:$0xff]
    %v227 = vld [vmem:[#allocation5 + $0x2e0] sm:$0xff]
    %v228 = vld [vmem:[#allocation5 + $0x2e8] sm:$0xff]
    %v229 = vld [vmem:[#allocation5 + $0x2f0] sm:$0xff]
    %v230 = vld [vmem:[#allocation5 + $0x2f8] sm:$0xff]
    %v231 = vld [vmem:[#allocation5 + $0x300] sm:$0xff]
    %v232 = vld [vmem:[#allocation5 + $0x308] sm:$0xff]
    %v233 = vld [vmem:[#allocation5 + $0x310] sm:$0xff]
    %v234 = vld [vmem:[#allocation5 + $0x318] sm:$0xff]
    %v235 = vld [vmem:[#allocation5 + $0x320] sm:$0xff]
    %v236 = vld [vmem:[#allocation5 + $0x328] sm:$0xff]
    %v237 = vld [vmem:[#allocation5 + $0x330] sm:$0xff]
    %v238 = vld [vmem:[#allocation5 + $0x338] sm:$0xff]
    %v239 = vld [vmem:[#allocation5 + $0x340] sm:$0xff]
    %v240 = vld [vmem:[#allocation5 + $0x348] sm:$0xff]
    %v241 = vld [vmem:[#allocation5 + $0x350] sm:$0xff]
    %v242 = vld [vmem:[#allocation5 + $0x358] sm:$0xff]
    %v243 = vld [vmem:[#allocation5 + $0x360] sm:$0xff]
    %v244 = vld [vmem:[#allocation5 + $0x368] sm:$0xff]
    %v245 = vld [vmem:[#allocation5 + $0x370] sm:$0xff]
    %v246 = vld [vmem:[#allocation5 + $0x378] sm:$0xff]
    %v247 = vld [vmem:[#allocation5 + $0x380] sm:$0xff]
    %v248 = vld [vmem:[#allocation5 + $0x388] sm:$0xff]
    %v249 = vld [vmem:[#allocation5 + $0x390] sm:$0xff]
    %v250 = vld [vmem:[#allocation5 + $0x398] sm:$0xff]
    %v251 = vld [vmem:[#allocation5 + $0x3a0] sm:$0xff]
    %v252 = vld [vmem:[#allocation5 + $0x3a8] sm:$0xff]
    %v253 = vld [vmem:[#allocation5 + $0x3b0] sm:$0xff]
    %v254 = vld [vmem:[#allocation5 + $0x3b8] sm:$0xff]
    %v255 = vld [vmem:[#allocation5 + $0x3c0] sm:$0xff]
    %v256 = vld [vmem:[#allocation5 + $0x3c8] sm:$0xff]
    %v257 = vld [vmem:[#allocation5 + $0x3d0] sm:$0xff]
    %v258 = vld [vmem:[#allocation5 + $0x3d8] sm:$0xff]
    %v259 = vld [vmem:[#allocation5 + $0x3e0] sm:$0xff]
    %v260 = vld [vmem:[#allocation5 + $0x3e8] sm:$0xff]
    %v261 = vld [vmem:[#allocation5 + $0x3f0] sm:$0xff]
    %v262 = vld [vmem:[#allocation5 + $0x3f8] sm:$0xff]
    %v263 = vld [vmem:[%s2] sm:$0x3]
    %v265 = vlaneseq
    %v266 = vshrl.u32 %v265, 7
    %v267 = vsub.s32 0, %v266
    %v268 = vrot.slane %v263, %v267
    %v269 = vlaneseq
    %v270 = vshrl.u32 %v269, 7
    %v271 = vsub.s32 1, %v270
    %v272 = vrot.slane %v263, %v271
    %v403 = vunpack.c.l.b16 %v135
    %v404 = vunpack.c.h.b16 %v135
    %v405 = vunpack.c.l.b16 %v136
    %v406 = vunpack.c.h.b16 %v136
    %v407 = vunpack.c.l.b16 %v137
    %v408 = vunpack.c.h.b16 %v137
    %v409 = vunpack.c.l.b16 %v138
    %v410 = vunpack.c.h.b16 %v138
    %v411 = vunpack.c.l.b16 %v139
    %v412 = vunpack.c.h.b16 %v139
    %v413 = vunpack.c.l.b16 %v140
    %v414 = vunpack.c.h.b16 %v140
    %v415 = vunpack.c.l.b16 %v141
    %v416 = vunpack.c.h.b16 %v141
    %v417 = vunpack.c.l.b16 %v142
    %v418 = vunpack.c.h.b16 %v142
    %v419 = vunpack.c.l.b16 %v143
    %v420 = vunpack.c.h.b16 %v143
    %v421 = vunpack.c.l.b16 %v144
    %v422 = vunpack.c.h.b16 %v144
    %v423 = vunpack.c.l.b16 %v145
    %v424 = vunpack.c.h.b16 %v145
    %v425 = vunpack.c.l.b16 %v146
    %v426 = vunpack.c.h.b16 %v146
    %v427 = vunpack.c.l.b16 %v147
    %v428 = vunpack.c.h.b16 %v147
    %v429 = vunpack.c.l.b16 %v148
    %v430 = vunpack.c.h.b16 %v148
    %v431 = vunpack.c.l.b16 %v149
    %v432 = vunpack.c.h.b16 %v149
    %v433 = vunpack.c.l.b16 %v150
    %v434 = vunpack.c.h.b16 %v150
    %v435 = vunpack.c.l.b16 %v151
    %v436 = vunpack.c.h.b16 %v151
    %v437 = vunpack.c.l.b16 %v152
    %v438 = vunpack.c.h.b16 %v152
    %v439 = vunpack.c.l.b16 %v153
    %v440 = vunpack.c.h.b16 %v153
    %v441 = vunpack.c.l.b16 %v154
    %v442 = vunpack.c.h.b16 %v154
    %v443 = vunpack.c.l.b16 %v155
    %v444 = vunpack.c.h.b16 %v155
    %v445 = vunpack.c.l.b16 %v156
    %v446 = vunpack.c.h.b16 %v156
    %v447 = vunpack.c.l.b16 %v157
    %v448 = vunpack.c.h.b16 %v157
    %v449 = vunpack.c.l.b16 %v158
    %v450 = vunpack.c.h.b16 %v158
    %v451 = vunpack.c.l.b16 %v159
    %v452 = vunpack.c.h.b16 %v159
    %v453 = vunpack.c.l.b16 %v160
    %v454 = vunpack.c.h.b16 %v160
    %v455 = vunpack.c.l.b16 %v161
    %v456 = vunpack.c.h.b16 %v161
    %v457 = vunpack.c.l.b16 %v162
    %v458 = vunpack.c.h.b16 %v162
    %v459 = vunpack.c.l.b16 %v163
    %v460 = vunpack.c.h.b16 %v163
    %v461 = vunpack.c.l.b16 %v164
    %v462 = vunpack.c.h.b16 %v164
    %v463 = vunpack.c.l.b16 %v165
    %v464 = vunpack.c.h.b16 %v165
    %v465 = vunpack.c.l.b16 %v166
    %v466 = vunpack.c.h.b16 %v166
    %v467 = vunpack.c.l.b16 %v167
    %v468 = vunpack.c.h.b16 %v167
    %v469 = vunpack.c.l.b16 %v168
    %v470 = vunpack.c.h.b16 %v168
    %v471 = vunpack.c.l.b16 %v169
    %v472 = vunpack.c.h.b16 %v169
    %v473 = vunpack.c.l.b16 %v170
    %v474 = vunpack.c.h.b16 %v170
    %v475 = vunpack.c.l.b16 %v171
    %v476 = vunpack.c.h.b16 %v171
    %v477 = vunpack.c.l.b16 %v172
    %v478 = vunpack.c.h.b16 %v172
    %v479 = vunpack.c.l.b16 %v173
    %v480 = vunpack.c.h.b16 %v173
    %v481 = vunpack.c.l.b16 %v174
    %v482 = vunpack.c.h.b16 %v174
    %v483 = vunpack.c.l.b16 %v175
    %v484 = vunpack.c.h.b16 %v175
    %v485 = vunpack.c.l.b16 %v176
    %v486 = vunpack.c.h.b16 %v176
    %v487 = vunpack.c.l.b16 %v177
    %v488 = vunpack.c.h.b16 %v177
    %v489 = vunpack.c.l.b16 %v178
    %v490 = vunpack.c.h.b16 %v178
    %v491 = vunpack.c.l.b16 %v179
    %v492 = vunpack.c.h.b16 %v179
    %v493 = vunpack.c.l.b16 %v180
    %v494 = vunpack.c.h.b16 %v180
    %v495 = vunpack.c.l.b16 %v181
    %v496 = vunpack.c.h.b16 %v181
    %v497 = vunpack.c.l.b16 %v182
    %v498 = vunpack.c.h.b16 %v182
    %v499 = vunpack.c.l.b16 %v183
    %v500 = vunpack.c.h.b16 %v183
    %v501 = vunpack.c.l.b16 %v184
    %v502 = vunpack.c.h.b16 %v184
    %v503 = vunpack.c.l.b16 %v185
    %v504 = vunpack.c.h.b16 %v185
    %v505 = vunpack.c.l.b16 %v186
    %v506 = vunpack.c.h.b16 %v186
    %v507 = vunpack.c.l.b16 %v187
    %v508 = vunpack.c.h.b16 %v187
    %v509 = vunpack.c.l.b16 %v188
    %v510 = vunpack.c.h.b16 %v188
    %v511 = vunpack.c.l.b16 %v189
    %v512 = vunpack.c.h.b16 %v189
    %v513 = vunpack.c.l.b16 %v190
    %v514 = vunpack.c.h.b16 %v190
    %v515 = vunpack.c.l.b16 %v191
    %v516 = vunpack.c.h.b16 %v191
    %v517 = vunpack.c.l.b16 %v192
    %v518 = vunpack.c.h.b16 %v192
    %v519 = vunpack.c.l.b16 %v193
    %v520 = vunpack.c.h.b16 %v193
    %v521 = vunpack.c.l.b16 %v194
    %v522 = vunpack.c.h.b16 %v194
    %v523 = vunpack.c.l.b16 %v195
    %v524 = vunpack.c.h.b16 %v195
    %v525 = vunpack.c.l.b16 %v196
    %v526 = vunpack.c.h.b16 %v196
    %v527 = vunpack.c.l.b16 %v197
    %v528 = vunpack.c.h.b16 %v197
    %v529 = vunpack.c.l.b16 %v198
    %v530 = vunpack.c.h.b16 %v198
    %v531 = vunpack.c.l.b16 %v199
    %v532 = vunpack.c.h.b16 %v199
    %v533 = vunpack.c.l.b16 %v200
    %v534 = vunpack.c.h.b16 %v200
    %v535 = vunpack.c.l.b16 %v201
    %v536 = vunpack.c.h.b16 %v201
    %v537 = vunpack.c.l.b16 %v202
    %v538 = vunpack.c.h.b16 %v202
    %v539 = vunpack.c.l.b16 %v203
    %v540 = vunpack.c.h.b16 %v203
    %v541 = vunpack.c.l.b16 %v204
    %v542 = vunpack.c.h.b16 %v204
    %v543 = vunpack.c.l.b16 %v205
    %v544 = vunpack.c.h.b16 %v205
    %v545 = vunpack.c.l.b16 %v206
    %v546 = vunpack.c.h.b16 %v206
    %v547 = vunpack.c.l.b16 %v207
    %v548 = vunpack.c.h.b16 %v207
    %v549 = vunpack.c.l.b16 %v208
    %v550 = vunpack.c.h.b16 %v208
    %v551 = vunpack.c.l.b16 %v209
    %v552 = vunpack.c.h.b16 %v209
    %v553 = vunpack.c.l.b16 %v210
    %v554 = vunpack.c.h.b16 %v210
    %v555 = vunpack.c.l.b16 %v211
    %v556 = vunpack.c.h.b16 %v211
    %v557 = vunpack.c.l.b16 %v212
    %v558 = vunpack.c.h.b16 %v212
    %v559 = vunpack.c.l.b16 %v213
    %v560 = vunpack.c.h.b16 %v213
    %v561 = vunpack.c.l.b16 %v214
    %v562 = vunpack.c.h.b16 %v214
    %v563 = vunpack.c.l.b16 %v215
    %v564 = vunpack.c.h.b16 %v215
    %v565 = vunpack.c.l.b16 %v216
    %v566 = vunpack.c.h.b16 %v216
    %v567 = vunpack.c.l.b16 %v217
    %v568 = vunpack.c.h.b16 %v217
    %v569 = vunpack.c.l.b16 %v218
    %v570 = vunpack.c.h.b16 %v218
    %v571 = vunpack.c.l.b16 %v219
    %v572 = vunpack.c.h.b16 %v219
    %v573 = vunpack.c.l.b16 %v220
    %v574 = vunpack.c.h.b16 %v220
    %v575 = vunpack.c.l.b16 %v221
    %v576 = vunpack.c.h.b16 %v221
    %v577 = vunpack.c.l.b16 %v222
    %v578 = vunpack.c.h.b16 %v222
    %v579 = vunpack.c.l.b16 %v223
    %v580 = vunpack.c.h.b16 %v223
    %v581 = vunpack.c.l.b16 %v224
    %v582 = vunpack.c.h.b16 %v224
    %v583 = vunpack.c.l.b16 %v225
    %v584 = vunpack.c.h.b16 %v225
    %v585 = vunpack.c.l.b16 %v226
    %v586 = vunpack.c.h.b16 %v226
    %v587 = vunpack.c.l.b16 %v227
    %v588 = vunpack.c.h.b16 %v227
    %v589 = vunpack.c.l.b16 %v228
    %v590 = vunpack.c.h.b16 %v228
    %v591 = vunpack.c.l.b16 %v229
    %v592 = vunpack.c.h.b16 %v229
    %v593 = vunpack.c.l.b16 %v230
    %v594 = vunpack.c.h.b16 %v230
    %v595 = vunpack.c.l.b16 %v231
    %v596 = vunpack.c.h.b16 %v231
    %v597 = vunpack.c.l.b16 %v232
    %v598 = vunpack.c.h.b16 %v232
    %v599 = vunpack.c.l.b16 %v233
    %v600 = vunpack.c.h.b16 %v233
    %v601 = vunpack.c.l.b16 %v234
    %v602 = vunpack.c.h.b16 %v234
    %v603 = vunpack.c.l.b16 %v235
    %v604 = vunpack.c.h.b16 %v235
    %v605 = vunpack.c.l.b16 %v236
    %v606 = vunpack.c.h.b16 %v236
    %v607 = vunpack.c.l.b16 %v237
    %v608 = vunpack.c.h.b16 %v237
    %v609 = vunpack.c.l.b16 %v238
    %v610 = vunpack.c.h.b16 %v238
    %v611 = vunpack.c.l.b16 %v239
    %v612 = vunpack.c.h.b16 %v239
    %v613 = vunpack.c.l.b16 %v240
    %v614 = vunpack.c.h.b16 %v240
    %v615 = vunpack.c.l.b16 %v241
    %v616 = vunpack.c.h.b16 %v241
    %v617 = vunpack.c.l.b16 %v242
    %v618 = vunpack.c.h.b16 %v242
    %v619 = vunpack.c.l.b16 %v243
    %v620 = vunpack.c.h.b16 %v243
    %v621 = vunpack.c.l.b16 %v244
    %v622 = vunpack.c.h.b16 %v244
    %v623 = vunpack.c.l.b16 %v245
    %v624 = vunpack.c.h.b16 %v245
    %v625 = vunpack.c.l.b16 %v246
    %v626 = vunpack.c.h.b16 %v246
    %v627 = vunpack.c.l.b16 %v247
    %v628 = vunpack.c.h.b16 %v247
    %v629 = vunpack.c.l.b16 %v248
    %v630 = vunpack.c.h.b16 %v248
    %v631 = vunpack.c.l.b16 %v249
    %v632 = vunpack.c.h.b16 %v249
    %v633 = vunpack.c.l.b16 %v250
    %v634 = vunpack.c.h.b16 %v250
    %v635 = vunpack.c.l.b16 %v251
    %v636 = vunpack.c.h.b16 %v251
    %v637 = vunpack.c.l.b16 %v252
    %v638 = vunpack.c.h.b16 %v252
    %v639 = vunpack.c.l.b16 %v253
    %v640 = vunpack.c.h.b16 %v253
    %v641 = vunpack.c.l.b16 %v254
    %v642 = vunpack.c.h.b16 %v254
    %v643 = vunpack.c.l.b16 %v255
    %v644 = vunpack.c.h.b16 %v255
    %v645 = vunpack.c.l.b16 %v256
    %v646 = vunpack.c.h.b16 %v256
    %v647 = vunpack.c.l.b16 %v257
    %v648 = vunpack.c.h.b16 %v257
    %v649 = vunpack.c.l.b16 %v258
    %v650 = vunpack.c.h.b16 %v258
    %v651 = vunpack.c.l.b16 %v259
    %v652 = vunpack.c.h.b16 %v259
    %v653 = vunpack.c.l.b16 %v260
    %v654 = vunpack.c.h.b16 %v260
    %v655 = vunpack.c.l.b16 %v261
    %v656 = vunpack.c.h.b16 %v261
    %v657 = vunpack.c.l.b16 %v262
    %v658 = vunpack.c.h.b16 %v262
    %v659 = vpack.c.b16 %v405, %v403
    %v660 = vpack.c.b16 %v406, %v404
    %v661 = vpack.c.b16 %v409, %v407
    %v662 = vpack.c.b16 %v410, %v408
    %v663 = vpack.c.b16 %v413, %v411
    %v664 = vpack.c.b16 %v414, %v412
    %v665 = vpack.c.b16 %v417, %v415
    %v666 = vpack.c.b16 %v418, %v416
    %v667 = vpack.c.b16 %v421, %v419
    %v668 = vpack.c.b16 %v422, %v420
    %v669 = vpack.c.b16 %v425, %v423
    %v670 = vpack.c.b16 %v426, %v424
    %v671 = vpack.c.b16 %v429, %v427
    %v672 = vpack.c.b16 %v430, %v428
    %v673 = vpack.c.b16 %v433, %v431
    %v674 = vpack.c.b16 %v434, %v432
    %v675 = vpack.c.b16 %v437, %v435
    %v676 = vpack.c.b16 %v438, %v436
    %v677 = vpack.c.b16 %v441, %v439
    %v678 = vpack.c.b16 %v442, %v440
    %v679 = vpack.c.b16 %v445, %v443
    %v680 = vpack.c.b16 %v446, %v444
    %v681 = vpack.c.b16 %v449, %v447
    %v682 = vpack.c.b16 %v450, %v448
    %v683 = vpack.c.b16 %v453, %v451
    %v684 = vpack.c.b16 %v454, %v452
    %v685 = vpack.c.b16 %v457, %v455
    %v686 = vpack.c.b16 %v458, %v456
    %v687 = vpack.c.b16 %v461, %v459
    %v688 = vpack.c.b16 %v462, %v460
    %v689 = vpack.c.b16 %v465, %v463
    %v690 = vpack.c.b16 %v466, %v464
    %v691 = vpack.c.b16 %v469, %v467
    %v692 = vpack.c.b16 %v470, %v468
    %v693 = vpack.c.b16 %v473, %v471
    %v694 = vpack.c.b16 %v474, %v472
    %v695 = vpack.c.b16 %v477, %v475
    %v696 = vpack.c.b16 %v478, %v476
    %v697 = vpack.c.b16 %v481, %v479
    %v698 = vpack.c.b16 %v482, %v480
    %v699 = vpack.c.b16 %v485, %v483
    %v700 = vpack.c.b16 %v486, %v484
    %v701 = vpack.c.b16 %v489, %v487
    %v702 = vpack.c.b16 %v490, %v488
    %v703 = vpack.c.b16 %v493, %v491
    %v704 = vpack.c.b16 %v494, %v492
    %v705 = vpack.c.b16 %v497, %v495
    %v706 = vpack.c.b16 %v498, %v496
    %v707 = vpack.c.b16 %v501, %v499
    %v708 = vpack.c.b16 %v502, %v500
    %v709 = vpack.c.b16 %v505, %v503
    %v710 = vpack.c.b16 %v506, %v504
    %v711 = vpack.c.b16 %v509, %v507
    %v712 = vpack.c.b16 %v510, %v508
    %v713 = vpack.c.b16 %v513, %v511
    %v714 = vpack.c.b16 %v514, %v512
    %v715 = vpack.c.b16 %v517, %v515
    %v716 = vpack.c.b16 %v518, %v516
    %v717 = vpack.c.b16 %v521, %v519
    %v718 = vpack.c.b16 %v522, %v520
    %v719 = vpack.c.b16 %v525, %v523
    %v720 = vpack.c.b16 %v526, %v524
    %v721 = vpack.c.b16 %v529, %v527
    %v722 = vpack.c.b16 %v530, %v528
    %v723 = vpack.c.b16 %v533, %v531
    %v724 = vpack.c.b16 %v534, %v532
    %v725 = vpack.c.b16 %v537, %v535
    %v726 = vpack.c.b16 %v538, %v536
    %v727 = vpack.c.b16 %v541, %v539
    %v728 = vpack.c.b16 %v542, %v540
    %v729 = vpack.c.b16 %v545, %v543
    %v730 = vpack.c.b16 %v546, %v544
    %v731 = vpack.c.b16 %v549, %v547
    %v732 = vpack.c.b16 %v550, %v548
    %v733 = vpack.c.b16 %v553, %v551
    %v734 = vpack.c.b16 %v554, %v552
    %v735 = vpack.c.b16 %v557, %v555
    %v736 = vpack.c.b16 %v558, %v556
    %v737 = vpack.c.b16 %v561, %v559
    %v738 = vpack.c.b16 %v562, %v560
    %v739 = vpack.c.b16 %v565, %v563
    %v740 = vpack.c.b16 %v566, %v564
    %v741 = vpack.c.b16 %v569, %v567
    %v742 = vpack.c.b16 %v570, %v568
    %v743 = vpack.c.b16 %v573, %v571
    %v744 = vpack.c.b16 %v574, %v572
    %v745 = vpack.c.b16 %v577, %v575
    %v746 = vpack.c.b16 %v578, %v576
    %v747 = vpack.c.b16 %v581, %v579
    %v748 = vpack.c.b16 %v582, %v580
    %v749 = vpack.c.b16 %v585, %v583
    %v750 = vpack.c.b16 %v586, %v584
    %v751 = vpack.c.b16 %v589, %v587
    %v752 = vpack.c.b16 %v590, %v588
    %v753 = vpack.c.b16 %v593, %v591
    %v754 = vpack.c.b16 %v594, %v592
    %v755 = vpack.c.b16 %v597, %v595
    %v756 = vpack.c.b16 %v598, %v596
    %v757 = vpack.c.b16 %v601, %v599
    %v758 = vpack.c.b16 %v602, %v600
    %v759 = vpack.c.b16 %v605, %v603
    %v760 = vpack.c.b16 %v606, %v604
    %v761 = vpack.c.b16 %v609, %v607
    %v762 = vpack.c.b16 %v610, %v608
    %v763 = vpack.c.b16 %v613, %v611
    %v764 = vpack.c.b16 %v614, %v612
    %v765 = vpack.c.b16 %v617, %v615
    %v766 = vpack.c.b16 %v618, %v616
    %v767 = vpack.c.b16 %v621, %v619
    %v768 = vpack.c.b16 %v622, %v620
    %v769 = vpack.c.b16 %v625, %v623
    %v770 = vpack.c.b16 %v626, %v624
    %v771 = vpack.c.b16 %v629, %v627
    %v772 = vpack.c.b16 %v630, %v628
    %v773 = vpack.c.b16 %v633, %v631
    %v774 = vpack.c.b16 %v634, %v632
    %v775 = vpack.c.b16 %v637, %v635
    %v776 = vpack.c.b16 %v638, %v636
    %v777 = vpack.c.b16 %v641, %v639
    %v778 = vpack.c.b16 %v642, %v640
    %v779 = vpack.c.b16 %v645, %v643
    %v780 = vpack.c.b16 %v646, %v644
    %v781 = vpack.c.b16 %v649, %v647
    %v782 = vpack.c.b16 %v650, %v648
    %v783 = vpack.c.b16 %v653, %v651
    %v784 = vpack.c.b16 %v654, %v652
    %v785 = vpack.c.b16 %v657, %v655
    %v786 = vpack.c.b16 %v658, %v656
    %915 = vmatprep.subr.bf16.mxu0 %v660
    %916 = vmatpush1.bf16.msra.mxu0 %v659
    %917 = vmatprep.subr.bf16.mxu0 %v662
    %918 = vmatpush1.bf16.msra.mxu0 %v661
    %919 = vmatprep.subr.bf16.mxu0 %v664
    %920 = vmatpush1.bf16.msra.mxu0 %v663
    %921 = vmatprep.subr.bf16.mxu0 %v666
    %922 = vmatpush1.bf16.msra.mxu0 %v665
    %923 = vmatprep.subr.bf16.mxu0 %v668
    %924 = vmatpush1.bf16.msra.mxu0 %v667
    %925 = vmatprep.subr.bf16.mxu0 %v670
    %926 = vmatpush1.bf16.msra.mxu0 %v669
    %927 = vmatprep.subr.bf16.mxu0 %v672
    %928 = vmatpush1.bf16.msra.mxu0 %v671
    %929 = vmatprep.subr.bf16.mxu0 %v674
    %930 = vmatpush1.bf16.msra.mxu0 %v673
    %931 = vmatprep.subr.bf16.mxu0 %v676
    %932 = vmatpush1.bf16.msra.mxu0 %v675
    %933 = vmatprep.subr.bf16.mxu0 %v678
    %934 = vmatpush1.bf16.msra.mxu0 %v677
    %935 = vmatprep.subr.bf16.mxu0 %v680
    %936 = vmatpush1.bf16.msra.mxu0 %v679
    %937 = vmatprep.subr.bf16.mxu0 %v682
    %938 = vmatpush1.bf16.msra.mxu0 %v681
    %939 = vmatprep.subr.bf16.mxu0 %v684
    %940 = vmatpush1.bf16.msra.mxu0 %v683
    %941 = vmatprep.subr.bf16.mxu0 %v686
    %942 = vmatpush1.bf16.msra.mxu0 %v685
    %943 = vmatprep.subr.bf16.mxu0 %v688
    %944 = vmatpush1.bf16.msra.mxu0 %v687
    %945 = vmatprep.subr.bf16.mxu0 %v690
    %946 = vmatpush1.bf16.msra.mxu0 %v689
    %947 = vmatprep.mubr.bf16.mxu0 %v128
    %948 = vmatmul.mubr.bf16.gmra.mrb[0].mxu0 %v127
    %v949 = vpop.f32.mrb[0].mxu0
    %v950 = vadd.f32 %v268, %v949
    %v951 = vpop.f32.mrb[0].mxu0
    %v952 = vadd.f32 %v272, %v951
    %v953 = vpop.f32.mrb[0].mxu0
    %v954 = vpop.f32.mrb[0].mxu0
    %955 = vdwg.mxu0
    %956 = vmatprep.subr.bf16.mxu0 %v692
    %957 = vmatpush1.bf16.msra.mxu0 %v691
    %958 = vmatprep.subr.bf16.mxu0 %v694
    %959 = vmatpush1.bf16.msra.mxu0 %v693
    %960 = vmatprep.subr.bf16.mxu0 %v696
    %961 = vmatpush1.bf16.msra.mxu0 %v695
    %962 = vmatprep.subr.bf16.mxu0 %v698
    %963 = vmatpush1.bf16.msra.mxu0 %v697
    %964 = vmatprep.subr.bf16.mxu0 %v700
    %965 = vmatpush1.bf16.msra.mxu0 %v699
    %966 = vmatprep.subr.bf16.mxu0 %v702
    %967 = vmatpush1.bf16.msra.mxu0 %v701
    %968 = vmatprep.subr.bf16.mxu0 %v704
    %969 = vmatpush1.bf16.msra.mxu0 %v703
    %970 = vmatprep.subr.bf16.mxu0 %v706
    %971 = vmatpush1.bf16.msra.mxu0 %v705
    %972 = vmatprep.subr.bf16.mxu0 %v708
    %973 = vmatpush1.bf16.msra.mxu0 %v707
    %974 = vmatprep.subr.bf16.mxu0 %v710
    %975 = vmatpush1.bf16.msra.mxu0 %v709
    %976 = vmatprep.subr.bf16.mxu0 %v712
    %977 = vmatpush1.bf16.msra.mxu0 %v711
    %978 = vmatprep.subr.bf16.mxu0 %v714
    %979 = vmatpush1.bf16.msra.mxu0 %v713
    %980 = vmatprep.subr.bf16.mxu0 %v716
    %981 = vmatpush1.bf16.msra.mxu0 %v715
    %982 = vmatprep.subr.bf16.mxu0 %v718
    %983 = vmatpush1.bf16.msra.mxu0 %v717
    %984 = vmatprep.subr.bf16.mxu0 %v720
    %985 = vmatpush1.bf16.msra.mxu0 %v719
    %986 = vmatprep.subr.bf16.mxu0 %v722
    %987 = vmatpush1.bf16.msra.mxu0 %v721
    %988 = vmatprep.mubr.bf16.mxu0 %v130
    %989 = vmatmul.mubr.bf16.gmra.mrb[0].mxu0 %v129
    %v990 = vpop.f32.mrb[0].mxu0
    %v991 = vadd.f32 %v950, %v990
    %v992 = vpop.f32.mrb[0].mxu0
    %v993 = vadd.f32 %v952, %v992
    %v994 = vpop.f32.mrb[0].mxu0
    %v995 = vpop.f32.mrb[0].mxu0
    %996 = vdwg.mxu0
    %997 = vmatprep.subr.bf16.mxu0 %v724
    %998 = vmatpush1.bf16.msra.mxu0 %v723
    %999 = vmatprep.subr.bf16.mxu0 %v726
    %1000 = vmatpush1.bf16.msra.mxu0 %v725
    %1001 = vmatprep.subr.bf16.mxu0 %v728
    %1002 = vmatpush1.bf16.msra.mxu0 %v727
    %1003 = vmatprep.subr.bf16.mxu0 %v730
    %1004 = vmatpush1.bf16.msra.mxu0 %v729
    %1005 = vmatprep.subr.bf16.mxu0 %v732
    %1006 = vmatpush1.bf16.msra.mxu0 %v731
    %1007 = vmatprep.subr.bf16.mxu0 %v734
    %1008 = vmatpush1.bf16.msra.mxu0 %v733
    %1009 = vmatprep.subr.bf16.mxu0 %v736
    %1010 = vmatpush1.bf16.msra.mxu0 %v735
    %1011 = vmatprep.subr.bf16.mxu0 %v738
    %1012 = vmatpush1.bf16.msra.mxu0 %v737
    %1013 = vmatprep.subr.bf16.mxu0 %v740
    %1014 = vmatpush1.bf16.msra.mxu0 %v739
    %1015 = vmatprep.subr.bf16.mxu0 %v742
    %1016 = vmatpush1.bf16.msra.mxu0 %v741
    %1017 = vmatprep.subr.bf16.mxu0 %v744
    %1018 = vmatpush1.bf16.msra.mxu0 %v743
    %1019 = vmatprep.subr.bf16.mxu0 %v746
    %1020 = vmatpush1.bf16.msra.mxu0 %v745
    %1021 = vmatprep.subr.bf16.mxu0 %v748
    %1022 = vmatpush1.bf16.msra.mxu0 %v747
    %1023 = vmatprep.subr.bf16.mxu0 %v750
    %1024 = vmatpush1.bf16.msra.mxu0 %v749
    %1025 = vmatprep.subr.bf16.mxu0 %v752
    %1026 = vmatpush1.bf16.msra.mxu0 %v751
    %1027 = vmatprep.subr.bf16.mxu0 %v754
    %1028 = vmatpush1.bf16.msra.mxu0 %v753
    %1029 = vmatprep.mubr.bf16.mxu0 %v132
    %1030 = vmatmul.mubr.bf16.gmra.mrb[0].mxu0 %v131
    %v1031 = vpop.f32.mrb[0].mxu0
    %v1032 = vadd.f32 %v991, %v1031
    %v1033 = vpop.f32.mrb[0].mxu0
    %v1034 = vadd.f32 %v993, %v1033
    %v1035 = vpop.f32.mrb[0].mxu0
    %v1036 = vpop.f32.mrb[0].mxu0
    %1037 = vdwg.mxu0
    %1038 = vmatprep.subr.bf16.mxu0 %v756
    %1039 = vmatpush1.bf16.msra.mxu0 %v755
    %1040 = vmatprep.subr.bf16.mxu0 %v758
    %1041 = vmatpush1.bf16.msra.mxu0 %v757
    %1042 = vmatprep.subr.bf16.mxu0 %v760
    %1043 = vmatpush1.bf16.msra.mxu0 %v759
    %1044 = vmatprep.subr.bf16.mxu0 %v762
    %1045 = vmatpush1.bf16.msra.mxu0 %v761
    %1046 = vmatprep.subr.bf16.mxu0 %v764
    %1047 = vmatpush1.bf16.msra.mxu0 %v763
    %1048 = vmatprep.subr.bf16.mxu0 %v766
    %1049 = vmatpush1.bf16.msra.mxu0 %v765
    %1050 = vmatprep.subr.bf16.mxu0 %v768
    %1051 = vmatpush1.bf16.msra.mxu0 %v767
    %1052 = vmatprep.subr.bf16.mxu0 %v770
    %1053 = vmatpush1.bf16.msra.mxu0 %v769
    %1054 = vmatprep.subr.bf16.mxu0 %v772
    %1055 = vmatpush1.bf16.msra.mxu0 %v771
    %1056 = vmatprep.subr.bf16.mxu0 %v774
    %1057 = vmatpush1.bf16.msra.mxu0 %v773
    %1058 = vmatprep.subr.bf16.mxu0 %v776
    %1059 = vmatpush1.bf16.msra.mxu0 %v775
    %1060 = vmatprep.subr.bf16.mxu0 %v778
    %1061 = vmatpush1.bf16.msra.mxu0 %v777
    %1062 = vmatprep.subr.bf16.mxu0 %v780
    %1063 = vmatpush1.bf16.msra.mxu0 %v779
    %1064 = vmatprep.subr.bf16.mxu0 %v782
    %1065 = vmatpush1.bf16.msra.mxu0 %v781
    %1066 = vmatprep.subr.bf16.mxu0 %v784
    %1067 = vmatpush1.bf16.msra.mxu0 %v783
    %1068 = vmatprep.subr.bf16.mxu0 %v786
    %1069 = vmatpush1.bf16.msra.mxu0 %v785
    %1070 = vmatprep.mubr.bf16.mxu0 %v134
    %1071 = vmatmul.mubr.bf16.gmra.mrb[0].mxu0 %v133
    %v1072 = vpop.f32.mrb[0].mxu0
    %v1073 = vadd.f32 %v1032, %v1072
    %v1074 = vpop.f32.mrb[0].mxu0
    %v1075 = vadd.f32 %v1034, %v1074
    %v1076 = vpop.f32.mrb[0].mxu0
    %v1077 = vpop.f32.mrb[0].mxu0
    %1078 = vdwg.mxu0
    %v1079 = vmax.f32 %v1073, 0.0
    %v1080 = vmax.f32 %v1075, 0.0
    %v1081 = vpack.c.bf16 %v1079, %v1079
    %v1082 = vpack.c.bf16 %v1080, %v1080
    %v1083 = vld [vmem:[#allocation7] sm:$0xf]
    %v1084 = vld [vmem:[#allocation7 + $0x4] sm:$0xf]
    %v1085 = vld [vmem:[#allocation7 + $0x8] sm:$0xf]
    %v1086 = vld [vmem:[#allocation7 + $0xc] sm:$0xf]
    %v1087 = vld [vmem:[#allocation7 + $0x10] sm:$0xf]
    %v1088 = vld [vmem:[#allocation7 + $0x14] sm:$0xf]
    %v1089 = vld [vmem:[#allocation7 + $0x18] sm:$0xf]
    %v1090 = vld [vmem:[#allocation7 + $0x1c] sm:$0xf]
    %v1091 = vld [vmem:[#allocation7 + $0x20] sm:$0xf]
    %v1092 = vld [vmem:[#allocation7 + $0x24] sm:$0xf]
    %v1093 = vld [vmem:[#allocation7 + $0x28] sm:$0xf]
    %v1094 = vld [vmem:[#allocation7 + $0x2c] sm:$0xf]
    %v1095 = vld [vmem:[#allocation7 + $0x30] sm:$0xf]
    %v1096 = vld [vmem:[#allocation7 + $0x34] sm:$0xf]
    %v1097 = vld [vmem:[#allocation7 + $0x38] sm:$0xf]
    %v1098 = vld [vmem:[#allocation7 + $0x3c] sm:$0xf]
    %v1099 = vld [vmem:[#allocation7 + $0x40] sm:$0xf]
    %v1100 = vld [vmem:[#allocation7 + $0x44] sm:$0xf]
    %v1101 = vld [vmem:[#allocation7 + $0x48] sm:$0xf]
    %v1102 = vld [vmem:[#allocation7 + $0x4c] sm:$0xf]
    %v1103 = vld [vmem:[#allocation7 + $0x50] sm:$0xf]
    %v1104 = vld [vmem:[#allocation7 + $0x54] sm:$0xf]
    %v1105 = vld [vmem:[#allocation7 + $0x58] sm:$0xf]
    %v1106 = vld [vmem:[#allocation7 + $0x5c] sm:$0xf]
    %v1107 = vld [vmem:[#allocation7 + $0x60] sm:$0xf]
    %v1108 = vld [vmem:[#allocation7 + $0x64] sm:$0xf]
    %v1109 = vld [vmem:[#allocation7 + $0x68] sm:$0xf]
    %v1110 = vld [vmem:[#allocation7 + $0x6c] sm:$0xf]
    %v1111 = vld [vmem:[#allocation7 + $0x70] sm:$0xf]
    %v1112 = vld [vmem:[#allocation7 + $0x74] sm:$0xf]
    %v1113 = vld [vmem:[#allocation7 + $0x78] sm:$0xf]
    %v1114 = vld [vmem:[#allocation7 + $0x7c] sm:$0xf]
    %v1115 = vld [vmem:[%s4] sm:$0x1]
    %v1117 = vlaneseq
    %v1118 = vshrl.u32 %v1117, 7
    %v1119 = vsub.s32 0, %v1118
    %v1120 = vrot.slane %v1115, %v1119
    %v1154 = vunpack.c.l.b16 %v1083
    %v1155 = vunpack.c.l.b16 %v1084
    %v1156 = vunpack.c.l.b16 %v1085
    %v1157 = vunpack.c.l.b16 %v1086
    %v1158 = vunpack.c.l.b16 %v1087
    %v1159 = vunpack.c.l.b16 %v1088
    %v1160 = vunpack.c.l.b16 %v1089
    %v1161 = vunpack.c.l.b16 %v1090
    %v1162 = vunpack.c.l.b16 %v1091
    %v1163 = vunpack.c.l.b16 %v1092
    %v1164 = vunpack.c.l.b16 %v1093
    %v1165 = vunpack.c.l.b16 %v1094
    %v1166 = vunpack.c.l.b16 %v1095
    %v1167 = vunpack.c.l.b16 %v1096
    %v1168 = vunpack.c.l.b16 %v1097
    %v1169 = vunpack.c.l.b16 %v1098
    %v1170 = vunpack.c.l.b16 %v1099
    %v1171 = vunpack.c.l.b16 %v1100
    %v1172 = vunpack.c.l.b16 %v1101
    %v1173 = vunpack.c.l.b16 %v1102
    %v1174 = vunpack.c.l.b16 %v1103
    %v1175 = vunpack.c.l.b16 %v1104
    %v1176 = vunpack.c.l.b16 %v1105
    %v1177 = vunpack.c.l.b16 %v1106
    %v1178 = vunpack.c.l.b16 %v1107
    %v1179 = vunpack.c.l.b16 %v1108
    %v1180 = vunpack.c.l.b16 %v1109
    %v1181 = vunpack.c.l.b16 %v1110
    %v1182 = vunpack.c.l.b16 %v1111
    %v1183 = vunpack.c.l.b16 %v1112
    %v1184 = vunpack.c.l.b16 %v1113
    %v1185 = vunpack.c.l.b16 %v1114
    %v1186 = vpack.c.b16 %v1155, %v1154
    %v1187 = vpack.c.b16 %v1157, %v1156
    %v1188 = vpack.c.b16 %v1159, %v1158
    %v1189 = vpack.c.b16 %v1161, %v1160
    %v1190 = vpack.c.b16 %v1163, %v1162
    %v1191 = vpack.c.b16 %v1165, %v1164
    %v1192 = vpack.c.b16 %v1167, %v1166
    %v1193 = vpack.c.b16 %v1169, %v1168
    %v1194 = vpack.c.b16 %v1171, %v1170
    %v1195 = vpack.c.b16 %v1173, %v1172
    %v1196 = vpack.c.b16 %v1175, %v1174
    %v1197 = vpack.c.b16 %v1177, %v1176
    %v1198 = vpack.c.b16 %v1179, %v1178
    %v1199 = vpack.c.b16 %v1181, %v1180
    %v1200 = vpack.c.b16 %v1183, %v1182
    %v1201 = vpack.c.b16 %v1185, %v1184
    %1218 = vmatprep.subr.bf16.mxu0 0
    %1219 = vmatpush1.bf16.msra.mxu0 %v1186
    %1220 = vmatprep.subr.bf16.mxu0 0
    %1221 = vmatpush1.bf16.msra.mxu0 %v1187
    %1222 = vmatprep.subr.bf16.mxu0 0
    %1223 = vmatpush1.bf16.msra.mxu0 %v1188
    %1224 = vmatprep.subr.bf16.mxu0 0
    %1225 = vmatpush1.bf16.msra.mxu0 %v1189
    %1226 = vmatprep.subr.bf16.mxu0 0
    %1227 = vmatpush1.bf16.msra.mxu0 %v1190
    %1228 = vmatprep.subr.bf16.mxu0 0
    %1229 = vmatpush1.bf16.msra.mxu0 %v1191
    %1230 = vmatprep.subr.bf16.mxu0 0
    %1231 = vmatpush1.bf16.msra.mxu0 %v1192
    %1232 = vmatprep.subr.bf16.mxu0 0
    %1233 = vmatpush1.bf16.msra.mxu0 %v1193
    %1234 = vmatprep.subr.bf16.mxu0 0
    %1235 = vmatpush1.bf16.msra.mxu0 %v1194
    %1236 = vmatprep.subr.bf16.mxu0 0
    %1237 = vmatpush1.bf16.msra.mxu0 %v1195
    %1238 = vmatprep.subr.bf16.mxu0 0
    %1239 = vmatpush1.bf16.msra.mxu0 %v1196
    %1240 = vmatprep.subr.bf16.mxu0 0
    %1241 = vmatpush1.bf16.msra.mxu0 %v1197
    %1242 = vmatprep.subr.bf16.mxu0 0
    %1243 = vmatpush1.bf16.msra.mxu0 %v1198
    %1244 = vmatprep.subr.bf16.mxu0 0
    %1245 = vmatpush1.bf16.msra.mxu0 %v1199
    %1246 = vmatprep.subr.bf16.mxu0 0
    %1247 = vmatpush1.bf16.msra.mxu0 %v1200
    %1248 = vmatprep.subr.bf16.mxu0 0
    %1249 = vmatpush1.bf16.msra.mxu0 %v1201
    %1250 = vmatprep.mubr.bf16.mxu0 %v1082
    %1251 = vmatmul.mubr.bf16.gmra.mrb[0].mxu0 %v1081
    %v1252 = vpop.f32.mrb[0].mxu0
    %v1253 = vadd.f32 %v1120, %v1252
    %v1254 = vpop.f32.mrb[0].mxu0
    %v1255 = vpop.f32.mrb[0].mxu0
    %v1256 = vpop.f32.mrb[0].mxu0
    %1257 = vdwg.mxu0
    %v1258 = vmax.f32 %v1253, 0.0
    %v1259 = vpack.c.bf16 %v1258, %v1258
    %v1260 = vld [vmem:[#allocation8] sm:$0xf]
    %v1261 = vld [vmem:[#allocation8 + $0x4] sm:$0xf]
    %v1262 = vld [vmem:[#allocation8 + $0x8] sm:$0xf]
    %v1263 = vld [vmem:[#allocation8 + $0xc] sm:$0xf]
    %v1264 = vld [vmem:[#allocation8 + $0x10] sm:$0xf]
    %v1265 = vld [vmem:[#allocation8 + $0x14] sm:$0xf]
    %v1266 = vld [vmem:[#allocation8 + $0x18] sm:$0xf]
    %v1267 = vld [vmem:[#allocation8 + $0x1c] sm:$0xf]
    %v1268 = vld [vmem:[#allocation8 + $0x20] sm:$0xf]
    %v1269 = vld [vmem:[#allocation8 + $0x24] sm:$0xf]
    %v1270 = vld [vmem:[#allocation8 + $0x28] sm:$0xf]
    %v1271 = vld [vmem:[#allocation8 + $0x2c] sm:$0xf]
    %v1272 = vld [vmem:[#allocation8 + $0x30] sm:$0xf]
    %v1273 = vld [vmem:[#allocation8 + $0x34] sm:$0xf]
    %v1274 = vld [vmem:[#allocation8 + $0x38] sm:$0xf]
    %v1275 = vld [vmem:[#allocation8 + $0x3c] sm:$0xf]
    %v1276 = vld [vmem:[%s6] sm:$0x1]
    %v1278 = vlaneseq
    %v1279 = vshrl.u32 %v1278, 7
    %v1280 = vsub.s32 0, %v1279
    %v1281 = vrot.slane %v1276, %v1280
    %v1299 = vunpack.c.l.b16 %v1260
    %v1300 = vunpack.c.l.b16 %v1261
    %v1301 = vunpack.c.l.b16 %v1262
    %v1302 = vunpack.c.l.b16 %v1263
    %v1303 = vunpack.c.l.b16 %v1264
    %v1304 = vunpack.c.l.b16 %v1265
    %v1305 = vunpack.c.l.b16 %v1266
    %v1306 = vunpack.c.l.b16 %v1267
    %v1307 = vunpack.c.l.b16 %v1268
    %v1308 = vunpack.c.l.b16 %v1269
    %v1309 = vunpack.c.l.b16 %v1270
    %v1310 = vunpack.c.l.b16 %v1271
    %v1311 = vunpack.c.l.b16 %v1272
    %v1312 = vunpack.c.l.b16 %v1273
    %v1313 = vunpack.c.l.b16 %v1274
    %v1314 = vunpack.c.l.b16 %v1275
    %v1315 = vpack.c.b16 %v1300, %v1299
    %v1316 = vpack.c.b16 %v1302, %v1301
    %v1317 = vpack.c.b16 %v1304, %v1303
    %v1318 = vpack.c.b16 %v1306, %v1305
    %v1319 = vpack.c.b16 %v1308, %v1307
    %v1320 = vpack.c.b16 %v1310, %v1309
    %v1321 = vpack.c.b16 %v1312, %v1311
    %v1322 = vpack.c.b16 %v1314, %v1313
    %1331 = vmatprep.subr.bf16.mxu0 0
    %1332 = vmatpush1.bf16.msra.mxu0 %v1315
    %1333 = vmatprep.subr.bf16.mxu0 0
    %1334 = vmatpush1.bf16.msra.mxu0 %v1316
    %1335 = vmatprep.subr.bf16.mxu0 0
    %1336 = vmatpush1.bf16.msra.mxu0 %v1317
    %1337 = vmatprep.subr.bf16.mxu0 0
    %1338 = vmatpush1.bf16.msra.mxu0 %v1318
    %1339 = vmatprep.subr.bf16.mxu0 0
    %1340 = vmatpush1.bf16.msra.mxu0 %v1319
    %1341 = vmatprep.subr.bf16.mxu0 0
    %1342 = vmatpush1.bf16.msra.mxu0 %v1320
    %1343 = vmatprep.subr.bf16.mxu0 0
    %1344 = vmatpush1.bf16.msra.mxu0 %v1321
    %1345 = vmatprep.subr.bf16.mxu0 0
    %1346 = vmatpush1.bf16.msra.mxu0 %v1322
    %1347 = vmatprep.subr.bf16.mxu0 0
    %1348 = vmatpush1.bf16.msra.mxu0 0
    %1349 = vmatprep.subr.bf16.mxu0 0
    %1350 = vmatpush1.bf16.msra.mxu0 0
    %1351 = vmatprep.subr.bf16.mxu0 0
    %1352 = vmatpush1.bf16.msra.mxu0 0
    %1353 = vmatprep.subr.bf16.mxu0 0
    %1354 = vmatpush1.bf16.msra.mxu0 0
    %1355 = vmatprep.subr.bf16.mxu0 0
    %1356 = vmatpush1.bf16.msra.mxu0 0
    %1357 = vmatprep.subr.bf16.mxu0 0
    %1358 = vmatpush1.bf16.msra.mxu0 0
    %1359 = vmatprep.subr.bf16.mxu0 0
    %1360 = vmatpush1.bf16.msra.mxu0 0
    %1361 = vmatprep.subr.bf16.mxu0 0
    %1362 = vmatpush1.bf16.msra.mxu0 0
    %1363 = vmatprep.mubr.bf16.mxu0 0
    %1364 = vmatmul.mubr.bf16.gmra.mrb[0].mxu0 %v1259
    %v1365 = vpop.f32.mrb[0].mxu0
    %v1366 = vadd.f32 %v1281, %v1365
    %v1367 = vpop.f32.mrb[0].mxu0
    %v1368 = vpop.f32.mrb[0].mxu0
    %v1369 = vpop.f32.mrb[0].mxu0
    %1370 = vdwg.mxu0
    %v1371 = vmax.f32 %v1366, 0.0
    %1372 = vst [vmem:[#allocation10] sm:$0x3] %v1371
    // Predicated region
    $region46: #{tpu_custom_call.1} parent=1 // pred_check
      _
    $region47: #{tpu_custom_call.1} parent=1 // pred_check_branch
      %1374 = sbr.rel (0) target = $region49
    $region48: #{tpu_custom_call.1} parent=1 // pred_region
      %s1376 = ssub.s32 32, 32
      %1377 = vsyncadd [#allocation4], %s1376
      %s1379 = sshll.u32 [#allocation10], 4
      %s1380 = int_to_ptr.vmem [resolvable:$true] %s1379
      %1382 = dma.vmem_to_hbm [thread:$0]  %s1380, 32, %s7, [#allocation4]
    $region49: #{tpu_custom_call.1} parent=1 // pred_fallthru
      _
    // Predicated region
    $region50: #{tpu_custom_call.1} parent=1 // pred_check
      _
    $region51: #{tpu_custom_call.1} parent=1 // pred_check_branch
      %1384 = sbr.rel (0) target = $region53
    $region52: #{tpu_custom_call.1} parent=1 // pred_region
      %1385 = dma.done [#allocation4], 32
    $region53: #{tpu_custom_call.1} parent=1 // pred_fallthru
      _
    %1386 = vsyncpa [#allocation3], 1
    %1387 = vsyncpa [#allocation6], 1
    %1388 = vsyncpa [#allocation9], 1
    %1389 = vsyncpa [#allocation4], 1

</llo_original>
